<compile_context>
chip_gen: v5e
topology: v5e:2x2
jax: 0.10.0
libtpu: 0.0.40
codegen_flags: <defaults>
</compile_context>

<pallas_src>
import functools

import jax
import jax.numpy as jnp
from jax.experimental import pallas as pl
from jax.experimental.pallas import tpu as pltpu


def _round_up(x, m):
    return ((x + m - 1) // m) * m


def _merged_loss_kernel(py_ref, ty_ref, dr_ref, di_ref, cr_ref, ci_ref,
                        out_ref, drug_acc, cell_acc, y_acc,
                        *, batch, tile_b, d_drug, d_cell, y_cols, needs_mask):
    pid = pl.program_id(0)
    last = pl.num_programs(0) - 1

    @pl.when(pid == 0)
    def _():
        drug_acc[...] = jnp.zeros_like(drug_acc)
        cell_acc[...] = jnp.zeros_like(cell_acc)
        y_acc[...] = jnp.zeros_like(y_acc)

    # Row-validity mask only when the last tile is partial (static decision).
    if needs_mask:
        row = jax.lax.broadcasted_iota(jnp.int32, (tile_b, 1), 0) + pid * tile_b
        valid = row < batch          # (tile_b, 1), broadcasts across lanes
    else:
        valid = None

    def sq_diff(a_ref, b_ref):
        # Native-dtype DMA, f32 math (mandatory on v5e, cheap on v6e/v7x).
        d = a_ref[...].astype(jnp.float32) - b_ref[...].astype(jnp.float32)
        d2 = d * d
        if valid is not None:
            d2 = jnp.where(valid, d2, 0.0)
        return d2

    # One sublane (batch-axis) reduce per stream per tile; the cross-lane
    # reduce is deferred to the final grid step (single XLU pass per stream).
    drug_acc[...] += jnp.sum(sq_diff(dr_ref, di_ref), axis=0, keepdims=True)
    cell_acc[...] += jnp.sum(sq_diff(cr_ref, ci_ref), axis=0, keepdims=True)
    y_acc[...] += jnp.sum(sq_diff(py_ref, ty_ref), axis=0, keepdims=True)

    @pl.when(pid == last)
    def _():
        # reduction='mean' over ALL elements of each original tensor.
        out_ref[0] = jnp.sum(y_acc[...]) * (1.0 / float(batch * y_cols))
        out_ref[1] = jnp.sum(drug_acc[...]) * (1.0 / float(batch * d_drug))
        out_ref[2] = jnp.sum(cell_acc[...]) * (1.0 / float(batch * d_cell))
        out_ref[3] = jnp.float32(0.0)  # padding lane


def _pick_batch_tile(batch, d_drug, d_cell, itemsize, vmem_budget_bytes):
    """Largest batch tile whose double-buffered input working set fits the budget."""
    # Padded lane width of one (pred, target) pair-row across the 3 streams.
    d_pad = _round_up(d_drug, 128) + _round_up(d_cell, 128) + 128
    per_row = 2 * 2 * d_pad * itemsize        # pred+target streams x 2 buffers
    tb = max(8, (vmem_budget_bytes // per_row) // 8 * 8)
    return min(tb, 2048, _round_up(batch, 8))


def merged_loss(pred_y, drug_reconstruction, cell_reconstruction,
                drug_input, cell_input, true_y, *, batch_tile=None):
    """Returns (output_loss, drug_reconstruction_loss, cell_reconstruction_loss)."""
    batch, d_drug = drug_reconstruction.shape
    d_cell = cell_reconstruction.shape[1]

    pred_y2 = pred_y.reshape(batch, -1)
    true_y2 = true_y.reshape(batch, -1)
    y_cols = pred_y2.shape[1]

    inputs = (pred_y2, true_y2, drug_reconstruction, drug_input,
              cell_reconstruction, cell_input)
    itemsize = max(x.dtype.itemsize for x in inputs)

    if batch_tile is None:
        # Budget sized for v7x's 64 MiB physical / 32 MiB scoped VMEM; v6e/v5e
        # have more headroom so this is safe everywhere.
        batch_tile = _pick_batch_tile(batch, d_drug, d_cell, itemsize,
                                      vmem_budget_bytes=16 << 20)
    tb = batch_tile
    num_tiles = pl.cdiv(batch, tb)
    needs_mask = (num_tiles * tb) != batch

    kernel = functools.partial(
        _merged_loss_kernel, batch=batch, tile_b=tb, d_drug=d_drug,
        d_cell=d_cell, y_cols=y_cols, needs_mask=needs_mask)

    def row_spec(d):
        return pl.BlockSpec((tb, d), lambda i: (i, 0))

    in_bytes = sum(x.size * x.dtype.itemsize for x in inputs)
    n_pair_elems = pred_y2.size + drug_reconstruction.size + cell_reconstruction.size

    out = pl.pallas_call(
        kernel,
        out_shape=jax.ShapeDtypeStruct((4,), jnp.float32),
        grid_spec=pltpu.PrefetchScalarGridSpec(
            num_scalar_prefetch=0,
            grid=(num_tiles,),
            in_specs=[row_spec(y_cols), row_spec(y_cols),
                      row_spec(d_drug), row_spec(d_drug),
                      row_spec(d_cell), row_spec(d_cell)],
            out_specs=pl.BlockSpec(memory_space=pltpu.MemorySpace.SMEM),
            scratch_shapes=[pltpu.VMEM((1, d_drug), jnp.float32),
                            pltpu.VMEM((1, d_cell), jnp.float32),
                            pltpu.VMEM((1, y_cols), jnp.float32)]),
        compiler_params=pltpu.CompilerParams(
            dimension_semantics=("arbitrary",),
            vmem_limit_bytes=32 << 20),
        cost_estimate=pl.CostEstimate(
            flops=3 * n_pair_elems,        # sub + mul + add-reduce per element
            transcendentals=0,
            bytes_accessed=in_bytes + 16),
    )(*inputs)

    return out[0], out[1], out[2]


if __name__ == "__main__":
    key = jax.random.PRNGKey(0)
    k1, k2, k3, k4, k5, k6 = jax.random.split(key, 6)

    B = 40           # batch (not a multiple of the forced tile -> tests masking)
    D_DRUG = 128     # drug feature dim
    D_CELL = 256     # cell-line feature dim

    pred_y = jax.random.normal(k1, (B, 1), dtype=jnp.float32)
    true_y = jax.random.normal(k2, (B, 1), dtype=jnp.float32)
    drug_reconstruction = jax.random.normal(k3, (B, D_DRUG), dtype=jnp.float32)
    drug_input = jax.random.normal(k4, (B, D_DRUG), dtype=jnp.float32)
    cell_reconstruction = jax.random.normal(k5, (B, D_CELL), dtype=jnp.float32)
    cell_input = jax.random.normal(k6, (B, D_CELL), dtype=jnp.float32)

    # Force a small batch tile so the multi-step accumulator grid and the
    # partial-last-tile masking path are exercised at toy shapes (grid = 3).
    fn = jax.jit(functools.partial(merged_loss, batch_tile=16))
    out = fn(pred_y, drug_reconstruction, cell_reconstruction,
             drug_input, cell_input, true_y)
    out = jax.block_until_ready(out)

    # Pure-JAX reference (same semantics as nn.MSELoss, reduction='mean').
    ref = (
        jnp.mean((pred_y - true_y) ** 2),
        jnp.mean((drug_reconstruction - drug_input) ** 2),
        jnp.mean((cell_reconstruction - cell_input) ** 2),
    )
    for got, want in zip(out, ref):
        assert jnp.allclose(got, want, rtol=1e-5, atol=1e-6), (got, want)

    print("KERNEL_OK")
</pallas_src>

<mosaic_0001>
module attributes {stable_mosaic.version = 11 : i64} {
  func.func @_merged_loss_kernel(%arg0: i32, %arg1: memref<16x1xf32, #tpu.memory_space<vmem>>, %arg2: memref<16x1xf32, #tpu.memory_space<vmem>>, %arg3: memref<16x128xf32, #tpu.memory_space<vmem>>, %arg4: memref<16x128xf32, #tpu.memory_space<vmem>>, %arg5: memref<16x256xf32, #tpu.memory_space<vmem>>, %arg6: memref<16x256xf32, #tpu.memory_space<vmem>>, %arg7: memref<4xf32, #tpu.memory_space<smem>>, %arg8: memref<1x128xf32, #tpu.memory_space<vmem>>, %arg9: memref<1x256xf32, #tpu.memory_space<vmem>>, %arg10: memref<1x1xf32, #tpu.memory_space<vmem>>) attributes {dimension_semantics = [#tpu.dimension_semantics<arbitrary>], iteration_bounds = array<i64: 3>, scalar_prefetch = 0 : i64, scratch_operands = 3 : i64, tpu.core_type = #tpu.core_type<tc>, window_params = [{transform_indices = @transform_0, window_bounds = array<i64: 16, 1>}, {transform_indices = @transform_1, window_bounds = array<i64: 16, 1>}, {transform_indices = @transform_2, window_bounds = array<i64: 16, 128>}, {transform_indices = @transform_3, window_bounds = array<i64: 16, 128>}, {transform_indices = @transform_4, window_bounds = array<i64: 16, 256>}, {transform_indices = @transform_5, window_bounds = array<i64: 16, 256>}, {transform_indices = @transform_6, window_bounds = array<i64: 4>}]} {
    %c0_i32 = arith.constant 0 : i32
    %0 = arith.cmpi eq, %arg0, %c0_i32 : i32
    %1 = arith.extui %0 : i1 to i32
    %c0_i32_0 = arith.constant 0 : i32
    %2 = arith.cmpi ne, %1, %c0_i32_0 : i32
    scf.if %2 {
      %cst_30 = arith.constant 0.000000e+00 : f32
      %49 = vector.broadcast %cst_30 : f32 to vector<1x128xf32>
      %c0_31 = arith.constant 0 : index
      %c0_32 = arith.constant 0 : index
      %50 = vector.load %arg8[%c0_31, %c0_32] : memref<1x128xf32, #tpu.memory_space<vmem>>, vector<1x128xf32>
      tpu.vector_store %arg8[%c0_31, %c0_32], %49 {strides = array<i32>} : memref<1x128xf32, #tpu.memory_space<vmem>>, vector<1x128xf32>,
      %cst_33 = arith.constant 0.000000e+00 : f32
      %51 = vector.broadcast %cst_33 : f32 to vector<1x256xf32>
      %c0_34 = arith.constant 0 : index
      %c0_35 = arith.constant 0 : index
      %52 = vector.load %arg9[%c0_34, %c0_35] : memref<1x256xf32, #tpu.memory_space<vmem>>, vector<1x256xf32>
      tpu.vector_store %arg9[%c0_34, %c0_35], %51 {strides = array<i32>} : memref<1x256xf32, #tpu.memory_space<vmem>>, vector<1x256xf32>,
      %cst_36 = arith.constant 0.000000e+00 : f32
      %53 = vector.broadcast %cst_36 : f32 to vector<1x1xf32>
      %c0_37 = arith.constant 0 : index
      %c0_38 = arith.constant 0 : index
      %54 = vector.load %arg10[%c0_37, %c0_38] : memref<1x1xf32, #tpu.memory_space<vmem>>, vector<1x1xf32>
      tpu.vector_store %arg10[%c0_37, %c0_38], %53 {strides = array<i32>} : memref<1x1xf32, #tpu.memory_space<vmem>>, vector<1x1xf32>,
    } else {
    }
    %3 = tpu.iota {dimensions = array<i32: 0>} : vector<16x1xi32>
    %c16_i32 = arith.constant 16 : i32
    %4 = arith.muli %arg0, %c16_i32 : i32
    %5 = vector.broadcast %4 : i32 to vector<16x1xi32>
    %6 = arith.addi %3, %5 : vector<16x1xi32>
    %c40_i32 = arith.constant 40 : i32
    %7 = vector.broadcast %c40_i32 : i32 to vector<16x1xi32>
    %8 = arith.cmpi slt, %6, %7 : vector<16x1xi32>
    %c0 = arith.constant 0 : index
    %c0_1 = arith.constant 0 : index
    %9 = vector.load %arg8[%c0, %c0_1] : memref<1x128xf32, #tpu.memory_space<vmem>>, vector<1x128xf32>
    %c0_2 = arith.constant 0 : index
    %c0_3 = arith.constant 0 : index
    %10 = vector.load %arg3[%c0_2, %c0_3] : memref<16x128xf32, #tpu.memory_space<vmem>>, vector<16x128xf32>
    %c0_4 = arith.constant 0 : index
    %c0_5 = arith.constant 0 : index
    %11 = vector.load %arg4[%c0_4, %c0_5] : memref<16x128xf32, #tpu.memory_space<vmem>>, vector<16x128xf32>
    %12 = arith.subf %10, %11 : vector<16x128xf32>
    %13 = arith.mulf %12, %12 : vector<16x128xf32>
    %cst = arith.constant 0.000000e+00 : f32
    %14 = vector.shape_cast %8 : vector<16x1xi1> to vector<16x1xi1>
    %15 = vector.broadcast %14 : vector<16x1xi1> to vector<16x128xi1>
    %16 = vector.broadcast %cst : f32 to vector<16x128xf32>
    %17 = arith.select %15, %13, %16 : vector<16x128xi1>, vector<16x128xf32>
    %cst_6 = arith.constant dense<0.000000e+00> : vector<128xf32>
    %18 = vector.multi_reduction <add>, %17, %cst_6 [0] : vector<16x128xf32> to vector<128xf32>
    %19 = vector.shape_cast %18 : vector<128xf32> to vector<1x128xf32>
    %20 = arith.addf %9, %19 : vector<1x128xf32>
    %c0_7 = arith.constant 0 : index
    %c0_8 = arith.constant 0 : index
    %21 = vector.load %arg8[%c0_7, %c0_8] : memref<1x128xf32, #tpu.memory_space<vmem>>, vector<1x128xf32>
    tpu.vector_store %arg8[%c0_7, %c0_8], %20 {strides = array<i32>} : memref<1x128xf32, #tpu.memory_space<vmem>>, vector<1x128xf32>,
    %c0_9 = arith.constant 0 : index
    %c0_10 = arith.constant 0 : index
    %22 = vector.load %arg9[%c0_9, %c0_10] : memref<1x256xf32, #tpu.memory_space<vmem>>, vector<1x256xf32>
    %c0_11 = arith.constant 0 : index
    %c0_12 = arith.constant 0 : index
    %23 = vector.load %arg5[%c0_11, %c0_12] : memref<16x256xf32, #tpu.memory_space<vmem>>, vector<16x256xf32>
    %c0_13 = arith.constant 0 : index
    %c0_14 = arith.constant 0 : index
    %24 = vector.load %arg6[%c0_13, %c0_14] : memref<16x256xf32, #tpu.memory_space<vmem>>, vector<16x256xf32>
    %25 = arith.subf %23, %24 : vector<16x256xf32>
    %26 = arith.mulf %25, %25 : vector<16x256xf32>
    %cst_15 = arith.constant 0.000000e+00 : f32
    %27 = vector.shape_cast %8 : vector<16x1xi1> to vector<16x1xi1>
    %28 = vector.broadcast %27 : vector<16x1xi1> to vector<16x256xi1>
    %29 = vector.broadcast %cst_15 : f32 to vector<16x256xf32>
    %30 = arith.select %28, %26, %29 : vector<16x256xi1>, vector<16x256xf32>
    %cst_16 = arith.constant dense<0.000000e+00> : vector<256xf32>
    %31 = vector.multi_reduction <add>, %30, %cst_16 [0] : vector<16x256xf32> to vector<256xf32>
    %32 = vector.shape_cast %31 : vector<256xf32> to vector<1x256xf32>
    %33 = arith.addf %22, %32 : vector<1x256xf32>
    %c0_17 = arith.constant 0 : index
    %c0_18 = arith.constant 0 : index
    %34 = vector.load %arg9[%c0_17, %c0_18] : memref<1x256xf32, #tpu.memory_space<vmem>>, vector<1x256xf32>
    tpu.vector_store %arg9[%c0_17, %c0_18], %33 {strides = array<i32>} : memref<1x256xf32, #tpu.memory_space<vmem>>, vector<1x256xf32>,
    %c0_19 = arith.constant 0 : index
    %c0_20 = arith.constant 0 : index
    %35 = vector.load %arg10[%c0_19, %c0_20] : memref<1x1xf32, #tpu.memory_space<vmem>>, vector<1x1xf32>
    %c0_21 = arith.constant 0 : index
    %c0_22 = arith.constant 0 : index
    %36 = vector.load %arg1[%c0_21, %c0_22] : memref<16x1xf32, #tpu.memory_space<vmem>>, vector<16x1xf32>
    %c0_23 = arith.constant 0 : index
    %c0_24 = arith.constant 0 : index
    %37 = vector.load %arg2[%c0_23, %c0_24] : memref<16x1xf32, #tpu.memory_space<vmem>>, vector<16x1xf32>
    %38 = arith.subf %36, %37 : vector<16x1xf32>
    %39 = arith.mulf %38, %38 : vector<16x1xf32>
    %cst_25 = arith.constant 0.000000e+00 : f32
    %40 = vector.broadcast %cst_25 : f32 to vector<16x1xf32>
    %41 = arith.select %8, %39, %40 : vector<16x1xi1>, vector<16x1xf32>
    %cst_26 = arith.constant dense<0.000000e+00> : vector<1xf32>
    %42 = vector.multi_reduction <add>, %41, %cst_26 [0] : vector<16x1xf32> to vector<1xf32>
    %43 = vector.shape_cast %42 : vector<1xf32> to vector<1x1xf32>
    %44 = arith.addf %35, %43 : vector<1x1xf32>
    %c0_27 = arith.constant 0 : index
    %c0_28 = arith.constant 0 : index
    %45 = vector.load %arg10[%c0_27, %c0_28] : memref<1x1xf32, #tpu.memory_space<vmem>>, vector<1x1xf32>
    tpu.vector_store %arg10[%c0_27, %c0_28], %44 {strides = array<i32>} : memref<1x1xf32, #tpu.memory_space<vmem>>, vector<1x1xf32>,
    %c2_i32 = arith.constant 2 : i32
    %46 = arith.cmpi eq, %arg0, %c2_i32 : i32
    %47 = arith.extui %46 : i1 to i32
    %c0_i32_29 = arith.constant 0 : i32
    %48 = arith.cmpi ne, %47, %c0_i32_29 : i32
    scf.if %48 {
      %c0_30 = arith.constant 0 : index
      %c0_31 = arith.constant 0 : index
      %49 = vector.load %arg10[%c0_30, %c0_31] : memref<1x1xf32, #tpu.memory_space<vmem>>, vector<1x1xf32>
      %50 = vector.shape_cast %49 : vector<1x1xf32> to vector<1x1x1xf32>
      %cst_32 = arith.constant dense<0.000000e+00> : vector<1xf32>
      %51 = vector.multi_reduction <add>, %50, %cst_32 [1, 2] : vector<1x1x1xf32> to vector<1xf32>
      %52 = vector.shape_cast %51 : vector<1xf32> to vector<1x1x1xf32>
      %53 = vector.extract %52[0, 0, 0] : f32 from vector<1x1x1xf32>
      %cst_33 = arith.constant 2.500000e-02 : f32
      %54 = arith.mulf %53, %cst_33 : f32
      %c0_34 = arith.constant 0 : index
      %55 = memref.load %arg7[%c0_34] : memref<4xf32, #tpu.memory_space<smem>>
      memref.store %54, %arg7[%c0_34] : memref<4xf32, #tpu.memory_space<smem>>
      %c0_35 = arith.constant 0 : index
      %c0_36 = arith.constant 0 : index
      %56 = vector.load %arg8[%c0_35, %c0_36] : memref<1x128xf32, #tpu.memory_space<vmem>>, vector<1x128xf32>
      %57 = vector.shape_cast %56 : vector<1x128xf32> to vector<1x1x128xf32>
      %cst_37 = arith.constant dense<0.000000e+00> : vector<1xf32>
      %58 = vector.multi_reduction <add>, %57, %cst_37 [1, 2] : vector<1x1x128xf32> to vector<1xf32>
      %59 = vector.shape_cast %58 : vector<1xf32> to vector<1x1x1xf32>
      %60 = vector.extract %59[0, 0, 0] : f32 from vector<1x1x1xf32>
      %cst_38 = arith.constant 1.95312503E-4 : f32
      %61 = arith.mulf %60, %cst_38 : f32
      %c1 = arith.constant 1 : index
      %62 = memref.load %arg7[%c1] : memref<4xf32, #tpu.memory_space<smem>>
      memref.store %61, %arg7[%c1] : memref<4xf32, #tpu.memory_space<smem>>
      %c0_39 = arith.constant 0 : index
      %c0_40 = arith.constant 0 : index
      %63 = vector.load %arg9[%c0_39, %c0_40] : memref<1x256xf32, #tpu.memory_space<vmem>>, vector<1x256xf32>
      %64 = vector.shape_cast %63 : vector<1x256xf32> to vector<1x1x256xf32>
      %cst_41 = arith.constant dense<0.000000e+00> : vector<1xf32>
      %65 = vector.multi_reduction <add>, %64, %cst_41 [1, 2] : vector<1x1x256xf32> to vector<1xf32>
      %66 = vector.shape_cast %65 : vector<1xf32> to vector<1x1x1xf32>
      %67 = vector.extract %66[0, 0, 0] : f32 from vector<1x1x1xf32>
      %cst_42 = arith.constant 9.76562514E-5 : f32
      %68 = arith.mulf %67, %cst_42 : f32
      %c2 = arith.constant 2 : index
      %69 = memref.load %arg7[%c2] : memref<4xf32, #tpu.memory_space<smem>>
      memref.store %68, %arg7[%c2] : memref<4xf32, #tpu.memory_space<smem>>
      %cst_43 = arith.constant 0.000000e+00 : f32
      %c3 = arith.constant 3 : index
      %70 = memref.load %arg7[%c3] : memref<4xf32, #tpu.memory_space<smem>>
      memref.store %cst_43, %arg7[%c3] : memref<4xf32, #tpu.memory_space<smem>>
    } else {
    }
    return
  }
  func.func @transform_0(%arg0: i32) -> (i32, i32) {
    %c0_i32 = arith.constant 0 : i32
    %c0_i32_0 = arith.constant 0 : i32
    return %arg0, %c0_i32 : i32, i32
  }
  func.func @transform_1(%arg0: i32) -> (i32, i32) {
    %c0_i32 = arith.constant 0 : i32
    %c0_i32_0 = arith.constant 0 : i32
    return %arg0, %c0_i32 : i32, i32
  }
  func.func @transform_2(%arg0: i32) -> (i32, i32) {
    %c0_i32 = arith.constant 0 : i32
    %c0_i32_0 = arith.constant 0 : i32
    return %arg0, %c0_i32 : i32, i32
  }
  func.func @transform_3(%arg0: i32) -> (i32, i32) {
    %c0_i32 = arith.constant 0 : i32
    %c0_i32_0 = arith.constant 0 : i32
    return %arg0, %c0_i32 : i32, i32
  }
  func.func @transform_4(%arg0: i32) -> (i32, i32) {
    %c0_i32 = arith.constant 0 : i32
    %c0_i32_0 = arith.constant 0 : i32
    return %arg0, %c0_i32 : i32, i32
  }
  func.func @transform_5(%arg0: i32) -> (i32, i32) {
    %c0_i32 = arith.constant 0 : i32
    %c0_i32_0 = arith.constant 0 : i32
    return %arg0, %c0_i32 : i32, i32
  }
  func.func @transform_6(%arg0: i32) -> i32 {
    %c0_i32 = arith.constant 0 : i32
    %c0_i32_0 = arith.constant 0 : i32
    return %c0_i32 : i32
  }
}

</mosaic_0001>

<llo_original>
// kernel: merged_loss.1
$region0: #{merged_loss.1}
  #allocation0 [shape = 'u32[]', space=smem, size = 0x4, offset = 0x4, fixed_abs, tag = 'smem constant byte address 0x4 - core index']
  #allocation1 [shape = 'u32[72,128]{1,0:T(1,128)}', space=vmem, size = 0x9000, scoped, tag = 'internal scratch']
  #allocation2 [shape = 'f32[1,128]{1,0:T(1,128)}', space=vmem, size = 0x200, scoped, tag = 'scratch operand']
  #allocation3 [shape = 'f32[1,256]{1,0:T(1,128)}', space=vmem, size = 0x400, scoped, tag = 'scratch operand']
  #allocation4 [shape = 'f32[1,1]{1,0:T(1,128)}', space=vmem, size = 0x200, scoped, tag = 'scratch operand']
  %s0 = inlined_call_operand.vmem [shape: f32[40,1], index: 0, kind: input, shape index: {}]
  %s1 = inlined_call_operand.vmem [shape: f32[40,1], index: 1, kind: input, shape index: {}]
  %s2 = inlined_call_operand.hbm [shape: f32[40,128], index: 2, kind: input, shape index: {}]
  %s3 = inlined_call_operand.hbm [shape: f32[40,128], index: 3, kind: input, shape index: {}]
  %s4 = inlined_call_operand.vmem [shape: f32[40,256], index: 4, kind: input, shape index: {}]
  %s5 = inlined_call_operand.hbm [shape: f32[40,256], index: 5, kind: input, shape index: {}]
  %s6 = inlined_call_operand.vmem [shape: f32[4], index: 6, kind: output, shape index: {}]
  %s7 = sld [smem:[#allocation0]]
  $region77: #{merged_loss.1} parent=0
    _
  %s9 = ssub.s32 1, %s7
  %s10 = scalar_select 0, %s9, %s7
  $region1: #{merged_loss.1} parent=0
    #allocation5 [shape = 'u8[16384]{0}', space=vmem, size = 0x4000, scoped, tag = 'input window, operand 2']
    #allocation6 [shape = 's32[2]{0}', space=sflag, size = 0x8, scoped, tag = 'scoped memory for merged_loss.1']
    #allocation7 [shape = 's32[2]{0}', space=sflag, size = 0x8, scoped, tag = 'scoped memory for merged_loss.1']
    #allocation8 [shape = 'u8[16384]{0}', space=vmem, size = 0x4000, scoped, tag = 'input window, operand 3']
    #allocation9 [shape = 's32[2]{0}', space=sflag, size = 0x8, scoped, tag = 'scoped memory for merged_loss.1']
    #allocation10 [shape = 'u8[32768]{0}', space=vmem, size = 0x8000, scoped, tag = 'input window, operand 5']
    #allocation11 [shape = 'u8[512]{0}', space=smem, size = 0x200, scoped, tag = 'output window, operand 0, single buffered']
    %11 = vsyncpa [#allocation6], 0
    %s12 = scalar_lea.sflag [#allocation6], 1
    %13 = vsyncpa %s12, 0
    %14 = vsyncpa [#allocation9], 0
    %s15 = scalar_lea.sflag [#allocation9], 1
    %16 = vsyncpa %s15, 0
    %17 = vsyncpa [#allocation7], 0
    loop: start=0, step=1, limit=5
    $region2: #{merged_loss.1} parent=1 // loop_pre_header
      _
    $region3: #{merged_loss.1} parent=1 // loop_header
      %s19 = sphi 0, %s23
      %p20 = scmp.ge.s32.totalorder %s19, 5
      %s29 = sphi 0, %s31
      %s32 = sphi 0, %s29
      %s33 = sphi 0, %s32
      %s49 = sphi 0, %s33
      %s55 = sphi 0, %s57
      %s58 = sphi 0, %s55
      %s59 = sphi 0, %s58
      %s75 = sphi 0, %s59
      %s81 = sphi 0, %s83
      %s84 = sphi 0, %s81
      %s85 = sphi 0, %s84
      %s101 = sphi 0, %s85
      %s107 = sphi 0, %s109
      %s110 = sphi 0, %s107
      %s111 = sphi 0, %s110
      %s127 = sphi 0, %s111
      %s133 = sphi 0, %s135
      %s136 = sphi 0, %s133
      %s137 = sphi 0, %s136
      %s153 = sphi 0, %s137
      %s159 = sphi 0, %s161
      %s162 = sphi 0, %s159
      %s163 = sphi 0, %s162
      %s179 = sphi 0, %s163
      %s183 = sphi 0, %s183
      %s185 = sphi 0, %s183
      %s186 = sphi 0, %s185
      %s200 = sphi 0, %s186
    $region4: #{merged_loss.1} parent=1 // loop_header_branch
      %22 = sbr.rel (%p20) target = $region8
    $region5: #{merged_loss.1} parent=1 // loop_body
      %s24 = ssub.s32 %s19, 1
      %s25 = ssub.s32 %s19, 2
      %s26 = sadd.s32 %s19, 1
      %s27 = ssub.s32 %s19, %s26
      %p28 = scmp.eq.s32.totalorder %s27, 0
      %s30 = sadd.s32 %s29, 1
      %s31 = scalar_select %p28, %s29, %s30
      %p34 = pneg %p28
      %p35 = scmp.eq.s32.totalorder %s19, 2
      %p36 = por %p34, %p35
      %p37 = scmp.ne.s32.totalorder %s29, %s32
      %p38 = scmp.eq.s32.totalorder %s19, 0
      %p39 = por %p37, %p38
      %p40 = scmp.ne.s32.totalorder %s29, %s32
      %p41 = scmp.eq.s32.totalorder %s24, 2
      %p42 = por %p40, %p41
      %p43 = scmp.ne.s32.totalorder %s32, %s33
      %p44 = scmp.eq.s32.totalorder %s24, 0
      %p45 = por %p43, %p44
      %p46 = scmp.ne.s32.totalorder %s32, %s33
      %p47 = scmp.eq.s32.totalorder %s25, 2
      %p48 = por %p46, %p47
      %p50 = scmp.ne.s32.totalorder %s33, %s49
      %p51 = scmp.eq.s32.totalorder %s25, 0
      %p52 = por %p50, %p51
      %s53 = ssub.s32 %s19, %s26
      %p54 = scmp.eq.s32.totalorder %s53, 0
      %s56 = sadd.s32 %s55, 1
      %s57 = scalar_select %p54, %s55, %s56
      %p60 = pneg %p54
      %p61 = scmp.eq.s32.totalorder %s19, 2
      %p62 = por %p60, %p61
      %p63 = scmp.ne.s32.totalorder %s55, %s58
      %p64 = scmp.eq.s32.totalorder %s19, 0
      %p65 = por %p63, %p64
      %p66 = scmp.ne.s32.totalorder %s55, %s58
      %p67 = scmp.eq.s32.totalorder %s24, 2
      %p68 = por %p66, %p67
      %p69 = scmp.ne.s32.totalorder %s58, %s59
      %p70 = scmp.eq.s32.totalorder %s24, 0
      %p71 = por %p69, %p70
      %p72 = scmp.ne.s32.totalorder %s58, %s59
      %p73 = scmp.eq.s32.totalorder %s25, 2
      %p74 = por %p72, %p73
      %p76 = scmp.ne.s32.totalorder %s59, %s75
      %p77 = scmp.eq.s32.totalorder %s25, 0
      %p78 = por %p76, %p77
      %s79 = ssub.s32 %s19, %s26
      %p80 = scmp.eq.s32.totalorder %s79, 0
      %s82 = sadd.s32 %s81, 1
      %s83 = scalar_select %p80, %s81, %s82
      %p86 = pneg %p80
      %p87 = scmp.eq.s32.totalorder %s19, 2
      %p88 = por %p86, %p87
      %p89 = scmp.ne.s32.totalorder %s81, %s84
      %p90 = scmp.eq.s32.totalorder %s19, 0
      %p91 = por %p89, %p90
      %p92 = scmp.ne.s32.totalorder %s81, %s84
      %p93 = scmp.eq.s32.totalorder %s24, 2
      %p94 = por %p92, %p93
      %p95 = scmp.ne.s32.totalorder %s84, %s85
      %p96 = scmp.eq.s32.totalorder %s24, 0
      %p97 = por %p95, %p96
      %p98 = scmp.ne.s32.totalorder %s84, %s85
      %p99 = scmp.eq.s32.totalorder %s25, 2
      %p100 = por %p98, %p99
      %p102 = scmp.ne.s32.totalorder %s85, %s101
      %p103 = scmp.eq.s32.totalorder %s25, 0
      %p104 = por %p102, %p103
      %s105 = ssub.s32 %s19, %s26
      %p106 = scmp.eq.s32.totalorder %s105, 0
      %s108 = sadd.s32 %s107, 1
      %s109 = scalar_select %p106, %s107, %s108
      %p112 = pneg %p106
      %p113 = scmp.eq.s32.totalorder %s19, 2
      %p114 = por %p112, %p113
      %p115 = scmp.ne.s32.totalorder %s107, %s110
      %p116 = scmp.eq.s32.totalorder %s19, 0
      %p117 = por %p115, %p116
      %p118 = scmp.ne.s32.totalorder %s107, %s110
      %p119 = scmp.eq.s32.totalorder %s24, 2
      %p120 = por %p118, %p119
      %p121 = scmp.ne.s32.totalorder %s110, %s111
      %p122 = scmp.eq.s32.totalorder %s24, 0
      %p123 = por %p121, %p122
      %p124 = scmp.ne.s32.totalorder %s110, %s111
      %p125 = scmp.eq.s32.totalorder %s25, 2
      %p126 = por %p124, %p125
      %p128 = scmp.ne.s32.totalorder %s111, %s127
      %p129 = scmp.eq.s32.totalorder %s25, 0
      %p130 = por %p128, %p129
      %s131 = ssub.s32 %s19, %s26
      %p132 = scmp.eq.s32.totalorder %s131, 0
      %s134 = sadd.s32 %s133, 1
      %s135 = scalar_select %p132, %s133, %s134
      %p138 = pneg %p132
      %p139 = scmp.eq.s32.totalorder %s19, 2
      %p140 = por %p138, %p139
      %p141 = scmp.ne.s32.totalorder %s133, %s136
      %p142 = scmp.eq.s32.totalorder %s19, 0
      %p143 = por %p141, %p142
      %p144 = scmp.ne.s32.totalorder %s133, %s136
      %p145 = scmp.eq.s32.totalorder %s24, 2
      %p146 = por %p144, %p145
      %p147 = scmp.ne.s32.totalorder %s136, %s137
      %p148 = scmp.eq.s32.totalorder %s24, 0
      %p149 = por %p147, %p148
      %p150 = scmp.ne.s32.totalorder %s136, %s137
      %p151 = scmp.eq.s32.totalorder %s25, 2
      %p152 = por %p150, %p151
      %p154 = scmp.ne.s32.totalorder %s137, %s153
      %p155 = scmp.eq.s32.totalorder %s25, 0
      %p156 = por %p154, %p155
      %s157 = ssub.s32 %s19, %s26
      %p158 = scmp.eq.s32.totalorder %s157, 0
      %s160 = sadd.s32 %s159, 1
      %s161 = scalar_select %p158, %s159, %s160
      %p164 = pneg %p158
      %p165 = scmp.eq.s32.totalorder %s19, 2
      %p166 = por %p164, %p165
      %p167 = scmp.ne.s32.totalorder %s159, %s162
      %p168 = scmp.eq.s32.totalorder %s19, 0
      %p169 = por %p167, %p168
      %p170 = scmp.ne.s32.totalorder %s159, %s162
      %p171 = scmp.eq.s32.totalorder %s24, 2
      %p172 = por %p170, %p171
      %p173 = scmp.ne.s32.totalorder %s162, %s163
      %p174 = scmp.eq.s32.totalorder %s24, 0
      %p175 = por %p173, %p174
      %p176 = scmp.ne.s32.totalorder %s162, %s163
      %p177 = scmp.eq.s32.totalorder %s25, 2
      %p178 = por %p176, %p177
      %p180 = scmp.ne.s32.totalorder %s163, %s179
      %p181 = scmp.eq.s32.totalorder %s25, 0
      %p182 = por %p180, %p181
      %s184 = sadd.s32 %s183, 1
      %p187 = scmp.eq.s32.totalorder %s19, 2
      %p188 = scmp.ne.s32.totalorder %s183, %s185
      %p189 = scmp.eq.s32.totalorder %s19, 0
      %p190 = por %p188, %p189
      %p191 = scmp.ne.s32.totalorder %s183, %s185
      %p192 = scmp.eq.s32.totalorder %s24, 2
      %p193 = por %p191, %p192
      %p194 = scmp.ne.s32.totalorder %s185, %s186
      %p195 = scmp.eq.s32.totalorder %s24, 0
      %p196 = por %p194, %p195
      %p197 = scmp.ne.s32.totalorder %s185, %s186
      %p198 = scmp.eq.s32.totalorder %s25, 2
      %p199 = por %p197, %p198
      %p201 = scmp.ne.s32.totalorder %s186, %s200
      %p202 = scmp.eq.s32.totalorder %s25, 0
      %p203 = por %p201, %p202
      %p204 = scmp.le.s32.totalorder 1, %s19
      %p205 = scmp.lt.s32.totalorder %s19, 4
      %p206 = pnand %p204, %p205
      %p207 = pneg %p206
      // Predicated region
      $region9: #{merged_loss.1} parent=5 // pred_check
        _
      $region10: #{merged_loss.1} parent=5 // pred_check_branch
        %209 = sbr.rel (%p206) target = $region12
      $region11: #{merged_loss.1} parent=5 // pred_region
        %s210 = ssub.s32 %s19, 1
      $region12: #{merged_loss.1} parent=5 // pred_fallthru
        _
      %p211 = scmp.lt.s32.totalorder %s19, 3
      // Predicated region
      $region13: #{merged_loss.1} parent=5 // pred_check
        %p212 = pneg %p211
      $region14: #{merged_loss.1} parent=5 // pred_check_branch
        %214 = sbr.rel (%p212) target = $region16
      $region15: #{merged_loss.1} parent=5 // pred_region
        // Predicated region
        $region17: #{merged_loss.1} parent=15 // pred_check
          %p215 = pneg %p39
        $region18: #{merged_loss.1} parent=15 // pred_check_branch
          %217 = sbr.rel (%p215) target = $region20
        $region19: #{merged_loss.1} parent=15 // pred_region
          %s218 = smul.u32 2, %s19
          %s219 = ssub.s32 5, %s218
          %p220 = scmp.lt.s32.totalorder %s219, 2
          %s221 = scalar_select %p220, %s219, 2
          %s222 = smul.u32 8, %s221
          %p223 = scmp.lt.s32.totalorder %s218, 4
          %s224 = scalar_select %p223, %s218, 4
          %s225 = smul.addr %s224, 8
          %s226 = scalar_lea.vmem %s0, %s225
          %s227 = smul.u32 2, %s19
          %s228 = ssub.s32 5, %s227
          %p229 = scmp.lt.s32.totalorder %s228, 2
          %s230 = scalar_select %p229, %s228, 2
          %s231 = smul.u32 8, %s230
        $region20: #{merged_loss.1} parent=15 // pred_fallthru
          _
        // Predicated region
        $region21: #{merged_loss.1} parent=15 // pred_check
          %p232 = pneg %p65
        $region22: #{merged_loss.1} parent=15 // pred_check_branch
          %234 = sbr.rel (%p232) target = $region24
        $region23: #{merged_loss.1} parent=15 // pred_region
          %s235 = smul.u32 2, %s19
          %s236 = ssub.s32 5, %s235
          %p237 = scmp.lt.s32.totalorder %s236, 2
          %s238 = scalar_select %p237, %s236, 2
          %s239 = smul.u32 8, %s238
          %p240 = scmp.lt.s32.totalorder %s235, 4
          %s241 = scalar_select %p240, %s235, 4
          %s242 = smul.addr %s241, 8
          %s243 = scalar_lea.vmem %s1, %s242
          %s244 = smul.u32 2, %s19
          %s245 = ssub.s32 5, %s244
          %p246 = scmp.lt.s32.totalorder %s245, 2
          %s247 = scalar_select %p246, %s245, 2
          %s248 = smul.u32 8, %s247
        $region24: #{merged_loss.1} parent=15 // pred_fallthru
          _
        // Predicated region
        $region25: #{merged_loss.1} parent=15 // pred_check
          %p249 = pneg %p91
        $region26: #{merged_loss.1} parent=15 // pred_check_branch
          %251 = sbr.rel (%p249) target = $region28
        $region27: #{merged_loss.1} parent=15 // pred_region
          %s252 = sand.u32 %s81, 1
          %s253 = scalar_lea.sflag [#allocation6], %s252
          %s254 = sand.u32 %s81, 1
          %s255 = smul.addr %s254, 16
          %s256 = scalar_lea.vmem [#allocation5], %s255
          %s257 = smul.u32 2, %s19
          %s258 = ssub.s32 5, %s257
          %p259 = scmp.lt.s32.totalorder %s258, 2
          %s260 = scalar_select %p259, %s258, 2
          %s261 = smul.u32 8, %s260
          %s262 = ssub.s32 16, %s261
          %s263 = sshll.u32 %s262, 4
          %264 = vsyncadd %s253, %s263
          %p265 = scmp.ne.s32.totalorder 0, %s261
          %s266 = smul.addr %s257, 8
          %s267 = scalar_lea.hbm %s2, %s266
          %s268 = smul.u32 8, %s260
          %s269 = sshll.u32 %s267, 4
          %s270 = int_to_ptr.hbm [resolvable:$true] %s269
          %s271 = sshll.u32 %s256, 4
          %s272 = int_to_ptr.vmem [resolvable:$true] %s271
          %s273 = sshll.u32 %s268, 4
          %277 = dma.hbm_to_vmem [thread:$0]  (%p265), %s270, %s273, %s272, %s253, 128, 128, 8
        $region28: #{merged_loss.1} parent=15 // pred_fallthru
          _
        // Predicated region
        $region29: #{merged_loss.1} parent=15 // pred_check
          %p278 = pneg %p117
        $region30: #{merged_loss.1} parent=15 // pred_check_branch
          %280 = sbr.rel (%p278) target = $region32
        $region31: #{merged_loss.1} parent=15 // pred_region
          %s281 = sand.u32 %s19, 1
          %s282 = scalar_lea.sflag [#allocation9], %s281
          %s283 = sand.u32 %s107, 1
          %s284 = smul.addr %s283, 16
          %s285 = scalar_lea.vmem [#allocation8], %s284
          %s286 = smul.u32 2, %s19
          %s287 = ssub.s32 5, %s286
          %p288 = scmp.lt.s32.totalorder %s287, 2
          %s289 = scalar_select %p288, %s287, 2
          %s290 = smul.u32 8, %s289
          %s291 = ssub.s32 16, %s290
          %s292 = sshll.u32 %s291, 4
          %293 = vsyncadd %s282, %s292
          %p294 = scmp.ne.s32.totalorder 0, %s290
          %s295 = smul.addr %s286, 8
          %s296 = scalar_lea.hbm %s3, %s295
          %s297 = smul.u32 8, %s289
          %s298 = sshll.u32 %s296, 4
          %s299 = int_to_ptr.hbm [resolvable:$true] %s298
          %s300 = sshll.u32 %s285, 4
          %s301 = int_to_ptr.vmem [resolvable:$true] %s300
          %s302 = sshll.u32 %s297, 4
          %306 = dma.hbm_to_vmem [thread:$0]  (%p294), %s299, %s302, %s301, %s282, 128, 128, 8
        $region32: #{merged_loss.1} parent=15 // pred_fallthru
          _
        // Predicated region
        $region33: #{merged_loss.1} parent=15 // pred_check
          %p307 = pneg %p143
        $region34: #{merged_loss.1} parent=15 // pred_check_branch
          %309 = sbr.rel (%p307) target = $region36
        $region35: #{merged_loss.1} parent=15 // pred_region
          %s310 = smul.u32 2, %s19
          %s311 = ssub.s32 5, %s310
          %p312 = scmp.lt.s32.totalorder %s311, 2
          %s313 = scalar_select %p312, %s311, 2
          %s314 = smul.u32 8, %s313
          %s315 = smul.u32 %s314, 2
          %p316 = scmp.lt.s32.totalorder %s310, 4
          %s317 = scalar_select %p316, %s310, 4
          %s318 = smul.addr %s317, 2
          %s319 = smul.addr %s318, 8
          %s320 = scalar_lea.vmem %s4, %s319
          %s321 = smul.u32 2, %s19
          %s322 = ssub.s32 5, %s321
          %p323 = scmp.lt.s32.totalorder %s322, 2
          %s324 = scalar_select %p323, %s322, 2
          %s325 = smul.u32 8, %s324
          %s326 = smul.u32 %s325, 2
        $region36: #{merged_loss.1} parent=15 // pred_fallthru
          _
        // Predicated region
        $region37: #{merged_loss.1} parent=15 // pred_check
          %p327 = pneg %p169
        $region38: #{merged_loss.1} parent=15 // pred_check_branch
          %329 = sbr.rel (%p327) target = $region40
        $region39: #{merged_loss.1} parent=15 // pred_region
          %s330 = sand.u32 %s19, 1
          %s331 = scalar_lea.sflag [#allocation9], %s330
          %s332 = sand.u32 %s159, 1
          %s333 = smul.addr %s332, 32
          %s334 = scalar_lea.vmem [#allocation10], %s333
          %s335 = smul.u32 2, %s19
          %s336 = ssub.s32 5, %s335
          %p337 = scmp.lt.s32.totalorder %s336, 2
          %s338 = scalar_select %p337, %s336, 2
          %s339 = smul.u32 8, %s338
          %s340 = smul.u32 %s339, 2
          %s341 = ssub.s32 32, %s340
          %s342 = sshll.u32 %s341, 4
          %343 = vsyncadd %s331, %s342
          %p344 = scmp.ne.s32.totalorder 0, %s340
          %s345 = smul.addr %s335, 2
          %s346 = smul.addr %s345, 8
          %s347 = scalar_lea.hbm %s5, %s346
          %s348 = smul.u32 16, %s338
          %s349 = sshll.u32 %s347, 4
          %s350 = int_to_ptr.hbm [resolvable:$true] %s349
          %s351 = sshll.u32 %s334, 4
          %s352 = int_to_ptr.vmem [resolvable:$true] %s351
          %s353 = sshll.u32 %s348, 4
          %357 = dma.hbm_to_vmem [thread:$0]  (%p344), %s350, %s353, %s352, %s331, 256, 256, 16
        $region40: #{merged_loss.1} parent=15 // pred_fallthru
          _
      $region16: #{merged_loss.1} parent=5 // pred_fallthru
        _
      %p358 = scmp.le.s32.totalorder 1, %s19
      %p359 = scmp.lt.s32.totalorder %s19, 4
      %p360 = pnand %p358, %p359
      %p361 = pneg %p360
      // Predicated region
      $region41: #{merged_loss.1} parent=5 // pred_check
        _
      $region42: #{merged_loss.1} parent=5 // pred_check_branch
        %363 = sbr.rel (%p360) target = $region44
      $region43: #{merged_loss.1} parent=5 // pred_region
        %s364 = ssub.s32 %s19, 1
        %s365 = sand.u32 %s84, 1
        %s366 = scalar_lea.sflag [#allocation6], %s365
        %s367 = sand.u32 %s84, 1
        %s368 = smul.addr %s367, 16
        %s369 = scalar_lea.vmem [#allocation5], %s368
        // Predicated region
        $region45: #{merged_loss.1} parent=43 // pred_check
          %p370 = pneg %p97
        $region46: #{merged_loss.1} parent=43 // pred_check_branch
          %372 = sbr.rel (%p370) target = $region48
        $region47: #{merged_loss.1} parent=43 // pred_region
          %374 = dma.done %s366, 256
        $region48: #{merged_loss.1} parent=43 // pred_fallthru
          _
        %s375 = sand.u32 %s24, 1
        %s376 = scalar_lea.sflag [#allocation9], %s375
        %s377 = sand.u32 %s110, 1
        %s378 = smul.addr %s377, 16
        %s379 = scalar_lea.vmem [#allocation8], %s378
        // Predicated region
        $region49: #{merged_loss.1} parent=43 // pred_check
          %p380 = pneg %p123
        $region50: #{merged_loss.1} parent=43 // pred_check_branch
          %382 = sbr.rel (%p380) target = $region52
        $region51: #{merged_loss.1} parent=43 // pred_region
          %384 = dma.done %s376, 256
        $region52: #{merged_loss.1} parent=43 // pred_fallthru
          _
        %s385 = sand.u32 %s24, 1
        %s386 = scalar_lea.sflag [#allocation9], %s385
        %s387 = sand.u32 %s162, 1
        %s388 = smul.addr %s387, 32
        %s389 = scalar_lea.vmem [#allocation10], %s388
        // Predicated region
        $region53: #{merged_loss.1} parent=43 // pred_check
          %p390 = pneg %p175
        $region54: #{merged_loss.1} parent=43 // pred_check_branch
          %392 = sbr.rel (%p390) target = $region56
        $region55: #{merged_loss.1} parent=43 // pred_region
          %394 = dma.done %s386, 512
        $region56: #{merged_loss.1} parent=43 // pred_fallthru
          _
        %s395 = smul.u32 2, %s24
        %s396 = ssub.s32 5, %s395
        %p397 = scmp.lt.s32.totalorder %s396, 2
        %s398 = scalar_select %p397, %s396, 2
        %s399 = smul.u32 8, %s398
        %p400 = scmp.lt.s32.totalorder %s395, 4
        %s401 = scalar_select %p400, %s395, 4
        %s402 = smul.addr %s401, 8
        %s403 = scalar_lea.vmem %s0, %s402
        %p404 = pneg %p45
        %p405 = pneg %p42
        %s406 = smul.u32 2, %s24
        %s407 = ssub.s32 5, %s406
        %p408 = scmp.lt.s32.totalorder %s407, 2
        %s409 = scalar_select %p408, %s407, 2
        %s410 = smul.u32 8, %s409
        %p411 = scmp.lt.s32.totalorder %s406, 4
        %s412 = scalar_select %p411, %s406, 4
        %s413 = smul.addr %s412, 8
        %s414 = scalar_lea.vmem %s1, %s413
        %p415 = pneg %p71
        %p416 = pneg %p68
        %s417 = sand.u32 %s84, 1
        %s418 = scalar_lea.sflag [#allocation6], %s417
        %s419 = sand.u32 %s84, 1
        %s420 = smul.addr %s419, 16
        %s421 = scalar_lea.vmem [#allocation5], %s420
        %p422 = pneg %p97
        %p423 = pneg %p94
        %s424 = sand.u32 %s24, 1
        %s425 = scalar_lea.sflag [#allocation9], %s424
        %s426 = sand.u32 %s110, 1
        %s427 = smul.addr %s426, 16
        %s428 = scalar_lea.vmem [#allocation8], %s427
        %p429 = pneg %p123
        %p430 = pneg %p120
        %s431 = smul.u32 2, %s24
        %s432 = ssub.s32 5, %s431
        %p433 = scmp.lt.s32.totalorder %s432, 2
        %s434 = scalar_select %p433, %s432, 2
        %s435 = smul.u32 8, %s434
        %s436 = smul.u32 %s435, 2
        %p437 = scmp.lt.s32.totalorder %s431, 4
        %s438 = scalar_select %p437, %s431, 4
        %s439 = smul.addr %s438, 2
        %s440 = smul.addr %s439, 8
        %s441 = scalar_lea.vmem %s4, %s440
        %p442 = pneg %p149
        %p443 = pneg %p146
        %s444 = sand.u32 %s24, 1
        %s445 = scalar_lea.sflag [#allocation9], %s444
        %s446 = sand.u32 %s162, 1
        %s447 = smul.addr %s446, 32
        %s448 = scalar_lea.vmem [#allocation10], %s447
        %p449 = pneg %p175
        %p450 = pneg %p172
        %p451 = pneg %p196
        %p452 = pneg %p193
        %s453 = smul.u32 2, %s24
        %s454 = ssub.s32 5, %s453
        %p455 = scmp.lt.s32.totalorder %s454, 2
        %s456 = scalar_select %p455, %s454, 2
        %s457 = smul.u32 8, %s456
        %p458 = scmp.lt.s32.totalorder %s453, 4
        %s459 = scalar_select %p458, %s453, 4
        %s460 = smul.addr %s459, 8
        %s461 = scalar_lea.vmem %s0, %s460
        %s462 = smul.u32 2, %s24
        %s463 = ssub.s32 5, %s462
        %p464 = scmp.lt.s32.totalorder %s463, 2
        %s465 = scalar_select %p464, %s463, 2
        %s466 = smul.u32 8, %s465
        %s467 = smul.u32 2, %s24
        %s468 = ssub.s32 5, %s467
        %p469 = scmp.lt.s32.totalorder %s468, 2
        %s470 = scalar_select %p469, %s468, 2
        %s471 = smul.u32 8, %s470
        %p472 = scmp.lt.s32.totalorder %s467, 4
        %s473 = scalar_select %p472, %s467, 4
        %s474 = smul.addr %s473, 8
        %s475 = scalar_lea.vmem %s1, %s474
        %s476 = smul.u32 2, %s24
        %s477 = ssub.s32 5, %s476
        %p478 = scmp.lt.s32.totalorder %s477, 2
        %s479 = scalar_select %p478, %s477, 2
        %s480 = smul.u32 8, %s479
        %s481 = smul.u32 2, %s24
        %s482 = ssub.s32 5, %s481
        %p483 = scmp.lt.s32.totalorder %s482, 2
        %s484 = scalar_select %p483, %s482, 2
        %s485 = smul.u32 8, %s484
        %s486 = smul.u32 2, %s24
        %s487 = ssub.s32 5, %s486
        %p488 = scmp.lt.s32.totalorder %s487, 2
        %s489 = scalar_select %p488, %s487, 2
        %s490 = smul.u32 8, %s489
        %s491 = smul.u32 2, %s24
        %s492 = ssub.s32 5, %s491
        %p493 = scmp.lt.s32.totalorder %s492, 2
        %s494 = scalar_select %p493, %s492, 2
        %s495 = smul.u32 8, %s494
        %s496 = smul.u32 %s495, 2
        %p497 = scmp.lt.s32.totalorder %s491, 4
        %s498 = scalar_select %p497, %s491, 4
        %s499 = smul.addr %s498, 2
        %s500 = smul.addr %s499, 8
        %s501 = scalar_lea.vmem %s4, %s500
        %s502 = smul.u32 2, %s24
        %s503 = ssub.s32 5, %s502
        %p504 = scmp.lt.s32.totalorder %s503, 2
        %s505 = scalar_select %p504, %s503, 2
        %s506 = smul.u32 8, %s505
        %s507 = smul.u32 %s506, 2
        %s508 = smul.u32 2, %s24
        %s509 = ssub.s32 5, %s508
        %p510 = scmp.lt.s32.totalorder %s509, 2
        %s511 = scalar_select %p510, %s509, 2
        %s512 = smul.u32 8, %s511
        %s513 = smul.u32 %s512, 2
        %p514 = scmp.eq.s32.totalorder %s24, 0
        // Predicated region
        $region57: #{merged_loss.1} parent=43 // pred_check
          %p515 = pneg %p514
        $region58: #{merged_loss.1} parent=43 // pred_check_branch
          %517 = sbr.rel (%p515) target = $region60
        $region59: #{merged_loss.1} parent=43 // pred_region
          %518 = vst [vmem:[#allocation2] sm:$0x1] 0.0
          %v519 = vlaneseq
          %vm520 = vcmp.ge.s32.totalorder %v519, 0
          %vm521 = vcmp.lt.s32.totalorder %v519, 256
          %vm522 = vmand %vm520, %vm521
          %523 = vst.msk [vmem:[#allocation3] sm:$0x3] %vm522, 0.0
          %vm524 = vcmask 0
          %525 = vst.msk [vmem:[#allocation4] sm:$0x1] %vm524, 0.0
        $region60: #{merged_loss.1} parent=43 // pred_fallthru
          _
        %v526 = vlaneseq
        %v527 = vshrl.u32 %v526, 7
        %v528 = vadd.s32 %v527, 8
        %s529 = smul.u32 %s24, 16
        %v530 = vstv %s529
        %v531 = vadd.s32 %v527, %v530
        %v532 = vadd.s32 %v528, %v530
        %vm533 = vcmp.lt.s32.totalorder %v531, 40
        %vm534 = vcmp.lt.s32.totalorder %v532, 40
        %v535 = vld [vmem:[#allocation2] sm:$0x1]
        %v536 = vld [vmem:[%s369] sm:$0xff]
        %v537 = vld [vmem:[%s369 + $0x8] sm:$0xff]
        %v538 = vld [vmem:[%s379] sm:$0xff]
        %v539 = vld [vmem:[%s379 + $0x8] sm:$0xff]
        %v540 = vsub.f32 %v536, %v538
        %v541 = vsub.f32 %v537, %v539
        %v542 = vmul.f32 %v540, %v540
        %v543 = vmul.f32 %v541, %v541
        %v544 = vsel %vm533, 1, 0
        %v545 = vsel %vm534, 1, 0
        %vm546 = vcmp.eq.s32.totalorder %v544, 1
        %vm547 = vcmp.eq.s32.totalorder %v545, 1
        %v548 = vsel %vm546, %v542, 0.0
        %v549 = vsel %vm547, %v543, 0.0
        %v550 = vadd.f32 %v548, %v549
        %v551 = vrot.slane %v550, 4
        %v552 = vadd.f32 %v550, %v551
        %v553 = vrot.slane %v552, 2
        %v554 = vadd.f32 %v552, %v553
        %v555 = vrot.slane %v554, 1
        %v556 = vadd.f32 %v554, %v555
        %v557 = vadd.f32 %v535, %v556
        %558 = vst [vmem:[#allocation2] sm:$0x1] %v557
        %v559 = vld [vmem:[#allocation3] sm:$0x3]
        %v560 = vld [vmem:[%s501] sm:$0xff]
        %v561 = vld [vmem:[%s501 + $0x8] sm:$0xff]
        %v562 = vld [vmem:[%s501 + $0x10] sm:$0xff]
        %v563 = vld [vmem:[%s501 + $0x18] sm:$0xff]
        %v564 = vld [vmem:[%s389] sm:$0xff]
        %v565 = vld [vmem:[%s389 + $0x8] sm:$0xff]
        %v566 = vld [vmem:[%s389 + $0x10] sm:$0xff]
        %v567 = vld [vmem:[%s389 + $0x18] sm:$0xff]
        %v568 = vsub.f32 %v560, %v564
        %v569 = vsub.f32 %v561, %v565
        %v570 = vsub.f32 %v562, %v566
        %v571 = vsub.f32 %v563, %v567
        %v572 = vmul.f32 %v568, %v568
        %v573 = vmul.f32 %v569, %v569
        %v574 = vmul.f32 %v570, %v570
        %v575 = vmul.f32 %v571, %v571
        %v576 = vsel %vm546, %v572, 0.0
        %v577 = vsel %vm546, %v573, 0.0
        %v578 = vsel %vm547, %v574, 0.0
        %v579 = vsel %vm547, %v575, 0.0
        %v580 = vadd.f32 %v576, %v578
        %v581 = vrot.slane %v580, 4
        %v582 = vadd.f32 %v580, %v581
        %v583 = vrot.slane %v582, 2
        %v584 = vadd.f32 %v582, %v583
        %v585 = vrot.slane %v584, 1
        %v586 = vadd.f32 %v584, %v585
        %v587 = vadd.f32 %v577, %v579
        %v588 = vrot.slane %v587, 4
        %v589 = vadd.f32 %v587, %v588
        %v590 = vrot.slane %v589, 2
        %v591 = vadd.f32 %v589, %v590
        %v592 = vrot.slane %v591, 1
        %v593 = vadd.f32 %v591, %v592
        %v596 = vrot.slane %v593, 7
        %vm597 = vcmask 1040384
        %v598 = vsel %vm597, %v586, %v596
        %v600 = vadd.f32 %v559, %v598
        %v601 = vlaneseq
        %vm602 = vcmp.ge.s32.totalorder %v601, 0
        %vm603 = vcmp.lt.s32.totalorder %v601, 256
        %vm604 = vmand %vm602, %vm603
        %605 = vst.msk [vmem:[#allocation3] sm:$0x3] %vm604, %v600
        %v606 = vld [vmem:[#allocation4] sm:$0x1]
        %v607 = vld [vmem:[%s461] sm:$0xff]
        %v608 = vld [vmem:[%s461 + $0x8] sm:$0xff]
        %v609 = vld [vmem:[%s475] sm:$0xff]
        %v610 = vld [vmem:[%s475 + $0x8] sm:$0xff]
        %v611 = vsub.f32 %v607, %v609
        %v612 = vsub.f32 %v608, %v610
        %v613 = vmul.f32 %v611, %v611
        %v614 = vmul.f32 %v612, %v612
        %v615 = vsel %vm533, %v613, 0.0
        %v616 = vsel %vm534, %v614, 0.0
        %vm617 = vcmask 7168
        %v618 = vsel %vm617, %v615, 0.0
        %v619 = vsel %vm617, %v616, 0.0
        %v620 = vadd.f32 %v618, %v619
        %v621 = vrot.slane %v620, 4
        %v622 = vadd.f32 %v620, %v621
        %v623 = vrot.slane %v622, 2
        %v624 = vadd.f32 %v622, %v623
        %v625 = vrot.slane %v624, 1
        %v626 = vadd.f32 %v624, %v625
        %v627 = vadd.f32 %v606, %v626
        %vm628 = vcmask 0
        %629 = vst.msk [vmem:[#allocation4] sm:$0x1] %vm628, %v627
        %p630 = scmp.eq.s32.totalorder %s24, 2
        // Predicated region
        $region61: #{merged_loss.1} parent=43 // pred_check
          %p631 = pneg %p630
        $region62: #{merged_loss.1} parent=43 // pred_check_branch
          %633 = sbr.rel (%p631) target = $region64
        $region63: #{merged_loss.1} parent=43 // pred_region
          %v634 = vld [vmem:[#allocation4] sm:$0x1]
          %v635 = vadd.f32 %v634, 0.0
          %s636 = vtos %v635
          %s637 = smul.f32 %s636, 0.025
          %s638 = scalar_lea.smem [#allocation11], 0
          %639 = sst [smem:[%s638]] %s637
          %v640 = vld [vmem:[#allocation2] sm:$0x1]
          %v641 = vsel %vm597, %v640, 0.0
          %642 = vadd.xlane.f32.xlu0 %v641
          %v643 = vpop.xlane.xlu0 %642
          %v644 = vrot.slane %v643, 4
          %v645 = vadd.f32 %v643, %v644
          %v646 = vrot.slane %v645, 2
          %v647 = vadd.f32 %v645, %v646
          %v648 = vrot.slane %v647, 1
          %v649 = vadd.f32 %v647, %v648
          %s650 = vtos %v649
          %s651 = smul.f32 %s650, 0.0001953125
          %s652 = scalar_lea.smem [#allocation11], 1
          %653 = sst [smem:[%s652]] %s651
          %v654 = vld [vmem:[#allocation3] sm:$0x3]
          %v656 = vperm.slane %v654, 0
          %v657 = vperm.slane %v654, 1
          %v660 = vsel %vm597, %v656, 0.0
          %v661 = vsel %vm597, %v657, 0.0
          %v662 = vadd.f32 %v660, %v661
          %663 = vadd.xlane.f32.xlu0 %v662
          %v664 = vpop.xlane.xlu0 %663
          %v665 = vrot.slane %v664, 4
          %v666 = vadd.f32 %v664, %v665
          %v667 = vrot.slane %v666, 2
          %v668 = vadd.f32 %v666, %v667
          %v669 = vrot.slane %v668, 1
          %v670 = vadd.f32 %v668, %v669
          %s671 = vtos %v670
          %s672 = smul.f32 %s671, 9.765625e-05
          %s673 = scalar_lea.smem [#allocation11], 2
          %674 = sst [smem:[%s673]] %s672
          %s675 = scalar_lea.smem [#allocation11], 3
          %676 = sst [smem:[%s675]] 0.0
        $region64: #{merged_loss.1} parent=43 // pred_fallthru
          _
        // Predicated region
        $region65: #{merged_loss.1} parent=43 // pred_check
          %p677 = pneg %p193
        $region66: #{merged_loss.1} parent=43 // pred_check_branch
          %679 = sbr.rel (%p677) target = $region68
        $region67: #{merged_loss.1} parent=43 // pred_region
          %681 = vsyncadd [#allocation7], 0
          %s683 = sshll.u32 %s6, 4
          %s684 = int_to_ptr.vmem [resolvable:$true] %s683
          %686 = dma.smem_to_vmem [#allocation11], 16, %s684, [#allocation7]
        $region68: #{merged_loss.1} parent=43 // pred_fallthru
          _
        // Predicated region
        $region69: #{merged_loss.1} parent=43 // pred_check
          %p687 = pneg %p193
        $region70: #{merged_loss.1} parent=43 // pred_check_branch
          %689 = sbr.rel (%p687) target = $region72
        $region71: #{merged_loss.1} parent=43 // pred_region
          %691 = dma.done [#allocation7], 16
        $region72: #{merged_loss.1} parent=43 // pred_fallthru
          _
        %692 = sfence
      $region44: #{merged_loss.1} parent=5 // pred_fallthru
        _
      %p693 = scmp.le.s32.totalorder 2, %s19
      // Predicated region
      $region73: #{merged_loss.1} parent=5 // pred_check
        %p694 = pneg %p693
      $region74: #{merged_loss.1} parent=5 // pred_check_branch
        %696 = sbr.rel (%p694) target = $region76
      $region75: #{merged_loss.1} parent=5 // pred_region
        %s697 = ssub.s32 %s19, 2
      $region76: #{merged_loss.1} parent=5 // pred_fallthru
        _
    $region6: #{merged_loss.1} parent=1 // loop_footer
      %s23 = sadd.s32 1, %s19
    $region7: #{merged_loss.1} parent=1 // loop_footer_branch
      %18 = sbr.rel target = $region3
    $region8: #{merged_loss.1} parent=1 // loop_exit
      _
    %698 = vsyncpa [#allocation6], 1
    %s699 = scalar_lea.sflag [#allocation6], 1
    %700 = vsyncpa %s699, 1
    %701 = vsyncpa [#allocation9], 1
    %s702 = scalar_lea.sflag [#allocation9], 1
    %703 = vsyncpa %s702, 1
    %704 = vsyncpa [#allocation7], 1
    %s705 = scalar_lea.sflag [#allocation7], 1
    %706 = vsyncpa %s705, 1

</llo_original>
